<compile_context>
chip_gen: v6e
topology: v6e:2x2x1
jax: 0.10.0
libtpu: 0.0.40
codegen_flags: <defaults>
</compile_context>

<pallas_src>
import jax
import jax.numpy as jnp
from jax.experimental import pallas as pl
from jax.experimental.pallas import tpu as pltpu

OUT_LANES = 128                      # lane-dense packed output width
_COL_ACTION, _COL_NLP, _COL_ENT, _COL_VAL = 0, 1, 2, 3


def _policy_kernel(obs_ref, gum_ref,
                   wp_ref, bp_ref,
                   wab_ref, bab_ref,
                   wh_ref, bh_ref,
                   out_ref):
    f32 = jnp.float32

    x = obs_ref[...]                                                    # (TB, D) bf16

    # phi_body: Linear + ReLU (bf16 MXU operands, f32 accumulation)
    phi = jnp.maximum(
        jnp.dot(x, wp_ref[...], preferred_element_type=f32) + bp_ref[...], 0.0)

    # actor_body + critic_body fused into one lane-dense (H, 2H) matmul
    phi_ab = jnp.maximum(
        jnp.dot(phi.astype(wab_ref.dtype), wab_ref[...],
                preferred_element_type=f32) + bab_ref[...], 0.0)        # (TB, 2H)

    # fc_action + fc_critic fused: block-structured (2H, A+1) weight
    head = jnp.dot(phi_ab, wh_ref[...],
                   preferred_element_type=f32) + bh_ref[...]            # (TB, A+1)
    A = head.shape[-1] - 1
    logits = head[:, :A]                                                # (TB, A)
    value = head[:, A:A + 1]                                            # (TB, 1)

    # numerically-stable log-softmax; exp(z) reused for the entropy
    m = jnp.max(logits, axis=-1, keepdims=True)
    z = logits - m
    ez = jnp.exp(z)
    sez = jnp.sum(ez, axis=-1, keepdims=True)
    lse = jnp.log(sez)
    entropy = lse - jnp.sum(ez * z, axis=-1, keepdims=True) / sez       # (TB, 1)

    # Categorical sampling via Gumbel-argmax (noise supplied from outside)
    scores = logits + gum_ref[...]
    col = jax.lax.broadcasted_iota(jnp.int32, logits.shape, 1)
    smax = jnp.max(scores, axis=-1, keepdims=True)
    action = jnp.min(jnp.where(scores >= smax, col, A),
                     axis=-1, keepdims=True)                            # (TB, 1) int32

    # -log_prob(action) = lse - z[action]
    onehot = (col == action).astype(f32)
    nlp = lse - jnp.sum(onehot * z, axis=-1, keepdims=True)             # (TB, 1)

    # pack the four per-row scalars into one lane-dense (TB, 128) store
    lanes = jax.lax.broadcasted_iota(jnp.int32, out_ref.shape, 1)
    packed = jnp.where(lanes == _COL_ACTION, action.astype(f32),
             jnp.where(lanes == _COL_NLP, nlp,
             jnp.where(lanes == _COL_ENT, entropy,
             jnp.where(lanes == _COL_VAL, value, 0.0))))
    out_ref[...] = packed


@jax.jit
def categorical_actor_critic_policy(obs, fused, key):
    """obs: NCHW float32 [B, C, H, W]; fused: output of fuse_params; key: PRNG key."""
    B = obs.shape[0]
    obs_flat = obs.reshape(B, -1).astype(jnp.bfloat16)   # row-major == torch .view
    D = obs_flat.shape[1]
    A = fused["w_head"].shape[1] - 1

    # batch tiling: sublane-aligned, <=128 rows per grid step
    tile_b = min(128, ((B + 7) // 8) * 8)
    b_pad = ((B + tile_b - 1) // tile_b) * tile_b
    if b_pad != B:
        obs_flat = jnp.pad(obs_flat, ((0, b_pad - B), (0, 0)))

    # Gumbel noise for Categorical.sample() (Gumbel-argmax == categorical sampling)
    gumbel = jax.random.gumbel(key, (b_pad, A), jnp.float32)

    def weight_spec(arr):   # full-array block, resident across the batch grid
        return pl.BlockSpec(arr.shape, lambda i: (0, 0))

    compiler_params = None
    if jax.default_backend() == "tpu":
        compiler_params = pltpu.CompilerParams(
            dimension_semantics=("parallel",))

    packed = pl.pallas_call(
        _policy_kernel,
        out_shape=jax.ShapeDtypeStruct((b_pad, OUT_LANES), jnp.float32),
        grid=(b_pad // tile_b,),
        in_specs=[
            pl.BlockSpec((tile_b, D), lambda i: (i, 0)),    # obs tile (bf16)
            pl.BlockSpec((tile_b, A), lambda i: (i, 0)),    # gumbel noise tile
            weight_spec(fused["w_phi"]),
            weight_spec(fused["b_phi"]),
            weight_spec(fused["w_ab"]),
            weight_spec(fused["b_ab"]),
            weight_spec(fused["w_head"]),
            weight_spec(fused["b_head"]),
        ],
        out_specs=pl.BlockSpec((tile_b, OUT_LANES), lambda i: (i, 0)),
        compiler_params=compiler_params,
    )(obs_flat, gumbel,
      fused["w_phi"], fused["b_phi"],
      fused["w_ab"], fused["b_ab"],
      fused["w_head"], fused["b_head"])

    return {
        "action": packed[:B, _COL_ACTION].astype(jnp.int32),
        "neg_log_prob_a": packed[:B, _COL_NLP],
        "entropy": packed[:B, _COL_ENT],
        "value": packed[:B, _COL_VAL],     # matches torch .squeeze() on (B, 1)
    }


def init_params(key, d_in, hidden, action_dim):
    """Deterministic synthetic parameters (shapes follow the module's __init__)."""
    ks = jax.random.split(key, 5)

    def lin(k, fan_in, fan_out, w_scale=1.0):
        w = jax.random.normal(k, (fan_in, fan_out), jnp.float32)
        w = w * (w_scale / jnp.sqrt(jnp.float32(fan_in)))
        b = jnp.zeros((1, fan_out), jnp.float32)
        return w, b

    w_phi, b_phi = lin(ks[0], d_in, hidden)
    w_act, b_act = lin(ks[1], hidden, hidden)
    w_crit, b_crit = lin(ks[2], hidden, hidden)
    # fc_action / fc_critic use layer_init(..., w_scale=0.001)
    w_fca, b_fca = lin(ks[3], hidden, action_dim, w_scale=0.001)
    w_fcv, b_fcv = lin(ks[4], hidden, 1, w_scale=0.001)
    return dict(w_phi=w_phi, b_phi=b_phi, w_act=w_act, b_act=b_act,
                w_crit=w_crit, b_crit=b_crit, w_fca=w_fca, b_fca=b_fca,
                w_fcv=w_fcv, b_fcv=b_fcv)


def fuse_params(params):
    """One-time layout fusion: actor+critic bodies -> one (H, 2H) weight; the two
    linear heads -> one block-structured (2H, A+1) weight; big MXU operands bf16."""
    H = params["w_act"].shape[0]
    A = params["w_fca"].shape[1]
    w_ab = jnp.concatenate([params["w_act"], params["w_crit"]], axis=1)   # (H, 2H)
    b_ab = jnp.concatenate([params["b_act"], params["b_crit"]], axis=1)   # (1, 2H)
    w_head = jnp.zeros((2 * H, A + 1), jnp.float32)
    w_head = w_head.at[:H, :A].set(params["w_fca"])                       # actor block
    w_head = w_head.at[H:, A:].set(params["w_fcv"])                       # critic column
    b_head = jnp.concatenate([params["b_fca"], params["b_fcv"]], axis=1)  # (1, A+1)
    return dict(
        w_phi=params["w_phi"].astype(jnp.bfloat16),
        b_phi=params["b_phi"],
        w_ab=w_ab.astype(jnp.bfloat16),
        b_ab=b_ab,
        w_head=w_head,
        b_head=b_head,
    )


if __name__ == "__main__":
    root = jax.random.PRNGKey(0)
    k_obs, k_par, k_sample = jax.random.split(root, 3)

    B, C, Himg, Wimg = 8, 4, 16, 16      # obs in NCHW (PyTorch convention)
    HIDDEN = 128                         # lane-dense feature_dim (multiple of 128)
    ACTION_DIM = 15

    obs = jax.random.normal(k_obs, (B, C, Himg, Wimg), jnp.float32)
    params = init_params(k_par, C * Himg * Wimg, HIDDEN, ACTION_DIM)
    fused = fuse_params(params)

    out = categorical_actor_critic_policy(obs, fused, k_sample)
    out = jax.tree_util.tree_map(jax.block_until_ready, out)

    # shape / range checks
    assert out["action"].shape == (B,) and out["action"].dtype == jnp.int32
    assert out["neg_log_prob_a"].shape == (B,)
    assert out["entropy"].shape == (B,)
    assert out["value"].shape == (B,)
    assert bool(jnp.all(out["action"] >= 0)) and bool(jnp.all(out["action"] < ACTION_DIM))

    # pure-JAX reference on the same fused/bf16 parameters
    xf = obs.reshape(B, -1).astype(jnp.bfloat16)
    phi = jnp.maximum(
        jnp.dot(xf, fused["w_phi"], preferred_element_type=jnp.float32) + fused["b_phi"], 0.0)
    phi_ab = jnp.maximum(
        jnp.dot(phi.astype(jnp.bfloat16), fused["w_ab"],
                preferred_element_type=jnp.float32) + fused["b_ab"], 0.0)
    head = jnp.dot(phi_ab, fused["w_head"],
                   preferred_element_type=jnp.float32) + fused["b_head"]
    logits = head[:, :ACTION_DIM]
    value_ref = head[:, ACTION_DIM]
    logp = jax.nn.log_softmax(logits, axis=-1)
    ent_ref = -jnp.sum(jnp.exp(logp) * logp, axis=-1)
    nlp_ref = -logp[jnp.arange(B), out["action"]]

    assert bool(jnp.allclose(out["value"], value_ref, rtol=1e-2, atol=1e-2))
    assert bool(jnp.allclose(out["entropy"], ent_ref, rtol=1e-2, atol=1e-2))
    assert bool(jnp.allclose(out["neg_log_prob_a"], nlp_ref, rtol=1e-2, atol=1e-2))

    print("KERNEL_OK")
</pallas_src>

<mosaic_0001>
module attributes {stable_mosaic.version = 11 : i64} {
  func.func @_policy_kernel(%arg0: i32, %arg1: memref<8x1024xbf16, #tpu.memory_space<vmem>>, %arg2: memref<8x15xf32, #tpu.memory_space<vmem>>, %arg3: memref<1024x128xbf16, #tpu.memory_space<vmem>>, %arg4: memref<1x128xf32, #tpu.memory_space<vmem>>, %arg5: memref<128x256xbf16, #tpu.memory_space<vmem>>, %arg6: memref<1x256xf32, #tpu.memory_space<vmem>>, %arg7: memref<256x16xf32, #tpu.memory_space<vmem>>, %arg8: memref<1x16xf32, #tpu.memory_space<vmem>>, %arg9: memref<8x128xf32, #tpu.memory_space<vmem>>) attributes {dimension_semantics = [#tpu.dimension_semantics<arbitrary>], iteration_bounds = array<i64: 1>, scalar_prefetch = 0 : i64, scratch_operands = 0 : i64, tpu.core_type = #tpu.core_type<tc>, window_params = [{transform_indices = @transform_0, window_bounds = array<i64: 8, 1024>}, {transform_indices = @transform_1, window_bounds = array<i64: 8, 15>}, {pipeline_mode = #tpu.pipeline_mode<synchronous>, transform_indices = @transform_2, window_bounds = array<i64: 1024, 128>}, {pipeline_mode = #tpu.pipeline_mode<synchronous>, transform_indices = @transform_3, window_bounds = array<i64: 1, 128>}, {pipeline_mode = #tpu.pipeline_mode<synchronous>, transform_indices = @transform_4, window_bounds = array<i64: 128, 256>}, {pipeline_mode = #tpu.pipeline_mode<synchronous>, transform_indices = @transform_5, window_bounds = array<i64: 1, 256>}, {pipeline_mode = #tpu.pipeline_mode<synchronous>, transform_indices = @transform_6, window_bounds = array<i64: 256, 16>}, {pipeline_mode = #tpu.pipeline_mode<synchronous>, transform_indices = @transform_7, window_bounds = array<i64: 1, 16>}, {transform_indices = @transform_8, window_bounds = array<i64: 8, 128>}]} {
    %c0 = arith.constant 0 : index
    %c0_0 = arith.constant 0 : index
    %0 = vector.load %arg1[%c0, %c0_0] : memref<8x1024xbf16, #tpu.memory_space<vmem>>, vector<8x1024xbf16>
    %c0_1 = arith.constant 0 : index
    %c0_2 = arith.constant 0 : index
    %1 = vector.load %arg3[%c0_1, %c0_2] : memref<1024x128xbf16, #tpu.memory_space<vmem>>, vector<1024x128xbf16>
    %cst = arith.constant dense<0.000000e+00> : vector<8x128xf32>
    %2 = tpu.matmul %0, %1, %cst {dimension_numbers = #tpu.dot_dimension_numbers<[1], [0], [0], [1], [0, 0, 1, 1], [], []>} : vector<8x1024xbf16>, vector<1024x128xbf16>, vector<8x128xf32> -> vector<8x128xf32>
    %c0_3 = arith.constant 0 : index
    %c0_4 = arith.constant 0 : index
    %3 = vector.load %arg4[%c0_3, %c0_4] : memref<1x128xf32, #tpu.memory_space<vmem>>, vector<1x128xf32>
    %4 = vector.broadcast %3 : vector<1x128xf32> to vector<8x128xf32>
    %5 = arith.addf %2, %4 : vector<8x128xf32>
    %cst_5 = arith.constant 0.000000e+00 : f32
    %6 = vector.broadcast %cst_5 : f32 to vector<8x128xf32>
    %7 = arith.maximumf %5, %6 : vector<8x128xf32>
    %8 = arith.truncf %7 : vector<8x128xf32> to vector<8x128xbf16>
    %c0_6 = arith.constant 0 : index
    %c0_7 = arith.constant 0 : index
    %9 = vector.load %arg5[%c0_6, %c0_7] : memref<128x256xbf16, #tpu.memory_space<vmem>>, vector<128x256xbf16>
    %cst_8 = arith.constant dense<0.000000e+00> : vector<8x256xf32>
    %10 = tpu.matmul %8, %9, %cst_8 {dimension_numbers = #tpu.dot_dimension_numbers<[1], [0], [0], [1], [0, 0, 1, 1], [], []>} : vector<8x128xbf16>, vector<128x256xbf16>, vector<8x256xf32> -> vector<8x256xf32>
    %c0_9 = arith.constant 0 : index
    %c0_10 = arith.constant 0 : index
    %11 = vector.load %arg6[%c0_9, %c0_10] : memref<1x256xf32, #tpu.memory_space<vmem>>, vector<1x256xf32>
    %12 = vector.broadcast %11 : vector<1x256xf32> to vector<8x256xf32>
    %13 = arith.addf %10, %12 : vector<8x256xf32>
    %cst_11 = arith.constant 0.000000e+00 : f32
    %14 = vector.broadcast %cst_11 : f32 to vector<8x256xf32>
    %15 = arith.maximumf %13, %14 : vector<8x256xf32>
    %c0_12 = arith.constant 0 : index
    %c0_13 = arith.constant 0 : index
    %16 = vector.load %arg7[%c0_12, %c0_13] : memref<256x16xf32, #tpu.memory_space<vmem>>, vector<256x16xf32>
    %cst_14 = arith.constant dense<0.000000e+00> : vector<8x16xf32>
    %17 = tpu.matmul %15, %16, %cst_14 {dimension_numbers = #tpu.dot_dimension_numbers<[1], [0], [0], [1], [0, 0, 1, 1], [], []>} : vector<8x256xf32>, vector<256x16xf32>, vector<8x16xf32> -> vector<8x16xf32>
    %c0_15 = arith.constant 0 : index
    %c0_16 = arith.constant 0 : index
    %18 = vector.load %arg8[%c0_15, %c0_16] : memref<1x16xf32, #tpu.memory_space<vmem>>, vector<1x16xf32>
    %19 = vector.broadcast %18 : vector<1x16xf32> to vector<8x16xf32>
    %20 = arith.addf %17, %19 : vector<8x16xf32>
    %21 = vector.extract_strided_slice %20 {offsets = [0, 0], sizes = [8, 15], strides = [1, 1]} : vector<8x16xf32> to vector<8x15xf32>
    %22 = vector.extract_strided_slice %20 {offsets = [0, 15], sizes = [8, 1], strides = [1, 1]} : vector<8x16xf32> to vector<8x1xf32>
    %cst_17 = arith.constant dense<0xFF800000> : vector<8xf32>
    %23 = vector.multi_reduction <maximumf>, %21, %cst_17 [1] : vector<8x15xf32> to vector<8xf32>
    %24 = vector.shape_cast %23 : vector<8xf32> to vector<8x1xf32>
    %25 = vector.broadcast %24 : vector<8x1xf32> to vector<8x15xf32>
    %26 = arith.subf %21, %25 : vector<8x15xf32>
    %27 = math.exp %26 : vector<8x15xf32>
    %cst_18 = arith.constant dense<0.000000e+00> : vector<8xf32>
    %28 = vector.multi_reduction <add>, %27, %cst_18 [1] : vector<8x15xf32> to vector<8xf32>
    %29 = vector.shape_cast %28 : vector<8xf32> to vector<8x1xf32>
    %30 = math.log %29 : vector<8x1xf32>
    %31 = arith.mulf %27, %26 : vector<8x15xf32>
    %cst_19 = arith.constant dense<0.000000e+00> : vector<8xf32>
    %32 = vector.multi_reduction <add>, %31, %cst_19 [1] : vector<8x15xf32> to vector<8xf32>
    %33 = vector.shape_cast %32 : vector<8xf32> to vector<8x1xf32>
    %34 = arith.divf %33, %29 : vector<8x1xf32>
    %35 = arith.subf %30, %34 : vector<8x1xf32>
    %c0_20 = arith.constant 0 : index
    %c0_21 = arith.constant 0 : index
    %36 = vector.load %arg2[%c0_20, %c0_21] : memref<8x15xf32, #tpu.memory_space<vmem>>, vector<8x15xf32>
    %37 = arith.addf %21, %36 : vector<8x15xf32>
    %38 = tpu.iota {dimensions = array<i32: 1>} : vector<8x15xi32>
    %cst_22 = arith.constant dense<0xFF800000> : vector<8xf32>
    %39 = vector.multi_reduction <maximumf>, %37, %cst_22 [1] : vector<8x15xf32> to vector<8xf32>
    %40 = vector.shape_cast %39 : vector<8xf32> to vector<8x1xf32>
    %41 = vector.broadcast %40 : vector<8x1xf32> to vector<8x15xf32>
    %42 = arith.cmpf oge, %37, %41 : vector<8x15xf32>
    %c15_i32 = arith.constant 15 : i32
    %43 = vector.broadcast %c15_i32 : i32 to vector<8x15xi32>
    %44 = arith.select %42, %38, %43 : vector<8x15xi1>, vector<8x15xi32>
    %cst_23 = arith.constant dense<2147483647> : vector<8xi32>
    %45 = vector.multi_reduction <minsi>, %44, %cst_23 [1] : vector<8x15xi32> to vector<8xi32>
    %46 = vector.shape_cast %45 : vector<8xi32> to vector<8x1xi32>
    %47 = vector.broadcast %46 : vector<8x1xi32> to vector<8x15xi32>
    %48 = arith.cmpi eq, %38, %47 : vector<8x15xi32>
    %49 = arith.extui %48 : vector<8x15xi1> to vector<8x15xi32>
    %50 = arith.sitofp %49 : vector<8x15xi32> to vector<8x15xf32>
    %51 = arith.mulf %50, %26 : vector<8x15xf32>
    %cst_24 = arith.constant dense<0.000000e+00> : vector<8xf32>
    %52 = vector.multi_reduction <add>, %51, %cst_24 [1] : vector<8x15xf32> to vector<8xf32>
    %53 = vector.shape_cast %52 : vector<8xf32> to vector<8x1xf32>
    %54 = arith.subf %30, %53 : vector<8x1xf32>
    %55 = tpu.iota {dimensions = array<i32: 1>} : vector<8x128xi32>
    %c0_i32 = arith.constant 0 : i32
    %56 = vector.broadcast %c0_i32 : i32 to vector<8x128xi32>
    %57 = arith.cmpi eq, %55, %56 : vector<8x128xi32>
    %58 = arith.sitofp %46 : vector<8x1xi32> to vector<8x1xf32>
    %c1_i32 = arith.constant 1 : i32
    %59 = vector.broadcast %c1_i32 : i32 to vector<8x128xi32>
    %60 = arith.cmpi eq, %55, %59 : vector<8x128xi32>
    %c2_i32 = arith.constant 2 : i32
    %61 = vector.broadcast %c2_i32 : i32 to vector<8x128xi32>
    %62 = arith.cmpi eq, %55, %61 : vector<8x128xi32>
    %c3_i32 = arith.constant 3 : i32
    %63 = vector.broadcast %c3_i32 : i32 to vector<8x128xi32>
    %64 = arith.cmpi eq, %55, %63 : vector<8x128xi32>
    %cst_25 = arith.constant 0.000000e+00 : f32
    %65 = vector.shape_cast %22 : vector<8x1xf32> to vector<8x1xf32>
    %66 = vector.broadcast %65 : vector<8x1xf32> to vector<8x128xf32>
    %67 = vector.broadcast %cst_25 : f32 to vector<8x128xf32>
    %68 = arith.select %64, %66, %67 : vector<8x128xi1>, vector<8x128xf32>
    %69 = vector.shape_cast %35 : vector<8x1xf32> to vector<8x1xf32>
    %70 = vector.broadcast %69 : vector<8x1xf32> to vector<8x128xf32>
    %71 = arith.select %62, %70, %68 : vector<8x128xi1>, vector<8x128xf32>
    %72 = vector.shape_cast %54 : vector<8x1xf32> to vector<8x1xf32>
    %73 = vector.broadcast %72 : vector<8x1xf32> to vector<8x128xf32>
    %74 = arith.select %60, %73, %71 : vector<8x128xi1>, vector<8x128xf32>
    %75 = vector.shape_cast %58 : vector<8x1xf32> to vector<8x1xf32>
    %76 = vector.broadcast %75 : vector<8x1xf32> to vector<8x128xf32>
    %77 = arith.select %57, %76, %74 : vector<8x128xi1>, vector<8x128xf32>
    %c0_26 = arith.constant 0 : index
    %c0_27 = arith.constant 0 : index
    %78 = vector.load %arg9[%c0_26, %c0_27] : memref<8x128xf32, #tpu.memory_space<vmem>>, vector<8x128xf32>
    tpu.vector_store %arg9[%c0_26, %c0_27], %77 {strides = array<i32>} : memref<8x128xf32, #tpu.memory_space<vmem>>, vector<8x128xf32>,
    return
  }
  func.func @transform_0(%arg0: i32) -> (i32, i32) {
    %c0_i32 = arith.constant 0 : i32
    %c0_i32_0 = arith.constant 0 : i32
    return %arg0, %c0_i32 : i32, i32
  }
  func.func @transform_1(%arg0: i32) -> (i32, i32) {
    %c0_i32 = arith.constant 0 : i32
    %c0_i32_0 = arith.constant 0 : i32
    return %arg0, %c0_i32 : i32, i32
  }
  func.func @transform_2(%arg0: i32) -> (i32, i32) {
    %c0_i32 = arith.constant 0 : i32
    %c0_i32_0 = arith.constant 0 : i32
    %c0_i32_1 = arith.constant 0 : i32
    return %c0_i32, %c0_i32_0 : i32, i32
  }
  func.func @transform_3(%arg0: i32) -> (i32, i32) {
    %c0_i32 = arith.constant 0 : i32
    %c0_i32_0 = arith.constant 0 : i32
    %c0_i32_1 = arith.constant 0 : i32
    return %c0_i32, %c0_i32_0 : i32, i32
  }
  func.func @transform_4(%arg0: i32) -> (i32, i32) {
    %c0_i32 = arith.constant 0 : i32
    %c0_i32_0 = arith.constant 0 : i32
    %c0_i32_1 = arith.constant 0 : i32
    return %c0_i32, %c0_i32_0 : i32, i32
  }
  func.func @transform_5(%arg0: i32) -> (i32, i32) {
    %c0_i32 = arith.constant 0 : i32
    %c0_i32_0 = arith.constant 0 : i32
    %c0_i32_1 = arith.constant 0 : i32
    return %c0_i32, %c0_i32_0 : i32, i32
  }
  func.func @transform_6(%arg0: i32) -> (i32, i32) {
    %c0_i32 = arith.constant 0 : i32
    %c0_i32_0 = arith.constant 0 : i32
    %c0_i32_1 = arith.constant 0 : i32
    return %c0_i32, %c0_i32_0 : i32, i32
  }
  func.func @transform_7(%arg0: i32) -> (i32, i32) {
    %c0_i32 = arith.constant 0 : i32
    %c0_i32_0 = arith.constant 0 : i32
    %c0_i32_1 = arith.constant 0 : i32
    return %c0_i32, %c0_i32_0 : i32, i32
  }
  func.func @transform_8(%arg0: i32) -> (i32, i32) {
    %c0_i32 = arith.constant 0 : i32
    %c0_i32_0 = arith.constant 0 : i32
    return %arg0, %c0_i32 : i32, i32
  }
}

</mosaic_0001>

<llo_original>
// kernel: categorical_actor_critic_policy.1
$region0: #{categorical_actor_critic_policy.1}
  #allocation0 [shape = 'u32[]', space=smem, size = 0x4, offset = 0x4, fixed_abs, tag = 'smem constant byte address 0x4 - core index']
  #allocation1 [shape = 'u32[144,128]{1,0:T(1,128)}', space=vmem, size = 0x12000, scoped, tag = 'internal scratch']
  %s0 = inlined_call_operand.vmem [shape: bf16[8,1024], index: 0, kind: input, shape index: {}]
  %s1 = inlined_call_operand.vmem [shape: f32[8,15], index: 1, kind: input, shape index: {}]
  %s2 = inlined_call_operand.vmem [shape: bf16[1024,128], index: 2, kind: input, shape index: {}]
  %s3 = inlined_call_operand.vmem [shape: f32[1,128], index: 3, kind: input, shape index: {}]
  %s4 = inlined_call_operand.vmem [shape: bf16[128,256], index: 4, kind: input, shape index: {}]
  %s5 = inlined_call_operand.vmem [shape: f32[1,256], index: 5, kind: input, shape index: {}]
  %s6 = inlined_call_operand.vmem [shape: f32[256,16], index: 6, kind: input, shape index: {}]
  %s7 = inlined_call_operand.vmem [shape: f32[1,16], index: 7, kind: input, shape index: {}]
  %s8 = inlined_call_operand.vmem [shape: f32[8,128], index: 8, kind: output, shape index: {}]
  %s9 = sld [smem:[#allocation0]]
  $region42: #{categorical_actor_critic_policy.1} parent=0
    _
  %s11 = ssub.s32 1, %s9
  %s12 = scalar_select 0, %s11, %s9
  // Predicated region
  $region2: #{categorical_actor_critic_policy.1} parent=0 // pred_check
    _
  $region3: #{categorical_actor_critic_policy.1} parent=0 // pred_check_branch
    %14 = sbr.rel (0) target = $region5
  $region4: #{categorical_actor_critic_policy.1} parent=0 // pred_region
    _
  $region5: #{categorical_actor_critic_policy.1} parent=0 // pred_fallthru
    _
  // Predicated region
  $region6: #{categorical_actor_critic_policy.1} parent=0 // pred_check
    _
  $region7: #{categorical_actor_critic_policy.1} parent=0 // pred_check_branch
    %16 = sbr.rel (0) target = $region9
  $region8: #{categorical_actor_critic_policy.1} parent=0 // pred_region
    _
  $region9: #{categorical_actor_critic_policy.1} parent=0 // pred_fallthru
    _
  // Predicated region
  $region10: #{categorical_actor_critic_policy.1} parent=0 // pred_check
    _
  $region11: #{categorical_actor_critic_policy.1} parent=0 // pred_check_branch
    %18 = sbr.rel (0) target = $region13
  $region12: #{categorical_actor_critic_policy.1} parent=0 // pred_region
    _
  $region13: #{categorical_actor_critic_policy.1} parent=0 // pred_fallthru
    _
  // Predicated region
  $region14: #{categorical_actor_critic_policy.1} parent=0 // pred_check
    _
  $region15: #{categorical_actor_critic_policy.1} parent=0 // pred_check_branch
    %20 = sbr.rel (0) target = $region17
  $region16: #{categorical_actor_critic_policy.1} parent=0 // pred_region
    _
  $region17: #{categorical_actor_critic_policy.1} parent=0 // pred_fallthru
    _
  // Predicated region
  $region18: #{categorical_actor_critic_policy.1} parent=0 // pred_check
    _
  $region19: #{categorical_actor_critic_policy.1} parent=0 // pred_check_branch
    %22 = sbr.rel (0) target = $region21
  $region20: #{categorical_actor_critic_policy.1} parent=0 // pred_region
    _
  $region21: #{categorical_actor_critic_policy.1} parent=0 // pred_fallthru
    _
  // Predicated region
  $region22: #{categorical_actor_critic_policy.1} parent=0 // pred_check
    _
  $region23: #{categorical_actor_critic_policy.1} parent=0 // pred_check_branch
    %24 = sbr.rel (0) target = $region25
  $region24: #{categorical_actor_critic_policy.1} parent=0 // pred_region
    _
  $region25: #{categorical_actor_critic_policy.1} parent=0 // pred_fallthru
    _
  // Predicated region
  $region26: #{categorical_actor_critic_policy.1} parent=0 // pred_check
    _
  $region27: #{categorical_actor_critic_policy.1} parent=0 // pred_check_branch
    %26 = sbr.rel (0) target = $region29
  $region28: #{categorical_actor_critic_policy.1} parent=0 // pred_region
    _
  $region29: #{categorical_actor_critic_policy.1} parent=0 // pred_fallthru
    _
  // Predicated region
  $region30: #{categorical_actor_critic_policy.1} parent=0 // pred_check
    _
  $region31: #{categorical_actor_critic_policy.1} parent=0 // pred_check_branch
    %28 = sbr.rel (0) target = $region33
  $region32: #{categorical_actor_critic_policy.1} parent=0 // pred_region
    _
  $region33: #{categorical_actor_critic_policy.1} parent=0 // pred_fallthru
    _
  %v30 = vld [vmem:[%s0] sm:$0xff]
  %v31 = vld [vmem:[%s0 + $0x8] sm:$0xff]
  %v32 = vld [vmem:[%s0 + $0x10] sm:$0xff]
  %v33 = vld [vmem:[%s0 + $0x18] sm:$0xff]
  %v34 = vld [vmem:[%s2] sm:$0xf]
  %v35 = vld [vmem:[%s2 + $0x4] sm:$0xf]
  %v36 = vld [vmem:[%s2 + $0x8] sm:$0xf]
  %v37 = vld [vmem:[%s2 + $0xc] sm:$0xf]
  %v38 = vld [vmem:[%s2 + $0x10] sm:$0xf]
  %v39 = vld [vmem:[%s2 + $0x14] sm:$0xf]
  %v40 = vld [vmem:[%s2 + $0x18] sm:$0xf]
  %v41 = vld [vmem:[%s2 + $0x1c] sm:$0xf]
  %v42 = vld [vmem:[%s2 + $0x20] sm:$0xf]
  %v43 = vld [vmem:[%s2 + $0x24] sm:$0xf]
  %v44 = vld [vmem:[%s2 + $0x28] sm:$0xf]
  %v45 = vld [vmem:[%s2 + $0x2c] sm:$0xf]
  %v46 = vld [vmem:[%s2 + $0x30] sm:$0xf]
  %v47 = vld [vmem:[%s2 + $0x34] sm:$0xf]
  %v48 = vld [vmem:[%s2 + $0x38] sm:$0xf]
  %v49 = vld [vmem:[%s2 + $0x3c] sm:$0xf]
  %v50 = vld [vmem:[%s2 + $0x40] sm:$0xf]
  %v51 = vld [vmem:[%s2 + $0x44] sm:$0xf]
  %v52 = vld [vmem:[%s2 + $0x48] sm:$0xf]
  %v53 = vld [vmem:[%s2 + $0x4c] sm:$0xf]
  %v54 = vld [vmem:[%s2 + $0x50] sm:$0xf]
  %v55 = vld [vmem:[%s2 + $0x54] sm:$0xf]
  %v56 = vld [vmem:[%s2 + $0x58] sm:$0xf]
  %v57 = vld [vmem:[%s2 + $0x5c] sm:$0xf]
  %v58 = vld [vmem:[%s2 + $0x60] sm:$0xf]
  %v59 = vld [vmem:[%s2 + $0x64] sm:$0xf]
  %v60 = vld [vmem:[%s2 + $0x68] sm:$0xf]
  %v61 = vld [vmem:[%s2 + $0x6c] sm:$0xf]
  %v62 = vld [vmem:[%s2 + $0x70] sm:$0xf]
  %v63 = vld [vmem:[%s2 + $0x74] sm:$0xf]
  %v64 = vld [vmem:[%s2 + $0x78] sm:$0xf]
  %v65 = vld [vmem:[%s2 + $0x7c] sm:$0xf]
  %v66 = vld [vmem:[%s2 + $0x80] sm:$0xf]
  %v67 = vld [vmem:[%s2 + $0x84] sm:$0xf]
  %v68 = vld [vmem:[%s2 + $0x88] sm:$0xf]
  %v69 = vld [vmem:[%s2 + $0x8c] sm:$0xf]
  %v70 = vld [vmem:[%s2 + $0x90] sm:$0xf]
  %v71 = vld [vmem:[%s2 + $0x94] sm:$0xf]
  %v72 = vld [vmem:[%s2 + $0x98] sm:$0xf]
  %v73 = vld [vmem:[%s2 + $0x9c] sm:$0xf]
  %v74 = vld [vmem:[%s2 + $0xa0] sm:$0xf]
  %v75 = vld [vmem:[%s2 + $0xa4] sm:$0xf]
  %v76 = vld [vmem:[%s2 + $0xa8] sm:$0xf]
  %v77 = vld [vmem:[%s2 + $0xac] sm:$0xf]
  %v78 = vld [vmem:[%s2 + $0xb0] sm:$0xf]
  %v79 = vld [vmem:[%s2 + $0xb4] sm:$0xf]
  %v80 = vld [vmem:[%s2 + $0xb8] sm:$0xf]
  %v81 = vld [vmem:[%s2 + $0xbc] sm:$0xf]
  %v82 = vld [vmem:[%s2 + $0xc0] sm:$0xf]
  %v83 = vld [vmem:[%s2 + $0xc4] sm:$0xf]
  %v84 = vld [vmem:[%s2 + $0xc8] sm:$0xf]
  %v85 = vld [vmem:[%s2 + $0xcc] sm:$0xf]
  %v86 = vld [vmem:[%s2 + $0xd0] sm:$0xf]
  %v87 = vld [vmem:[%s2 + $0xd4] sm:$0xf]
  %v88 = vld [vmem:[%s2 + $0xd8] sm:$0xf]
  %v89 = vld [vmem:[%s2 + $0xdc] sm:$0xf]
  %v90 = vld [vmem:[%s2 + $0xe0] sm:$0xf]
  %v91 = vld [vmem:[%s2 + $0xe4] sm:$0xf]
  %v92 = vld [vmem:[%s2 + $0xe8] sm:$0xf]
  %v93 = vld [vmem:[%s2 + $0xec] sm:$0xf]
  %v94 = vld [vmem:[%s2 + $0xf0] sm:$0xf]
  %v95 = vld [vmem:[%s2 + $0xf4] sm:$0xf]
  %v96 = vld [vmem:[%s2 + $0xf8] sm:$0xf]
  %v97 = vld [vmem:[%s2 + $0xfc] sm:$0xf]
  %v98 = vld [vmem:[%s2 + $0x100] sm:$0xf]
  %v99 = vld [vmem:[%s2 + $0x104] sm:$0xf]
  %v100 = vld [vmem:[%s2 + $0x108] sm:$0xf]
  %v101 = vld [vmem:[%s2 + $0x10c] sm:$0xf]
  %v102 = vld [vmem:[%s2 + $0x110] sm:$0xf]
  %v103 = vld [vmem:[%s2 + $0x114] sm:$0xf]
  %v104 = vld [vmem:[%s2 + $0x118] sm:$0xf]
  %v105 = vld [vmem:[%s2 + $0x11c] sm:$0xf]
  %v106 = vld [vmem:[%s2 + $0x120] sm:$0xf]
  %v107 = vld [vmem:[%s2 + $0x124] sm:$0xf]
  %v108 = vld [vmem:[%s2 + $0x128] sm:$0xf]
  %v109 = vld [vmem:[%s2 + $0x12c] sm:$0xf]
  %v110 = vld [vmem:[%s2 + $0x130] sm:$0xf]
  %v111 = vld [vmem:[%s2 + $0x134] sm:$0xf]
  %v112 = vld [vmem:[%s2 + $0x138] sm:$0xf]
  %v113 = vld [vmem:[%s2 + $0x13c] sm:$0xf]
  %v114 = vld [vmem:[%s2 + $0x140] sm:$0xf]
  %v115 = vld [vmem:[%s2 + $0x144] sm:$0xf]
  %v116 = vld [vmem:[%s2 + $0x148] sm:$0xf]
  %v117 = vld [vmem:[%s2 + $0x14c] sm:$0xf]
  %v118 = vld [vmem:[%s2 + $0x150] sm:$0xf]
  %v119 = vld [vmem:[%s2 + $0x154] sm:$0xf]
  %v120 = vld [vmem:[%s2 + $0x158] sm:$0xf]
  %v121 = vld [vmem:[%s2 + $0x15c] sm:$0xf]
  %v122 = vld [vmem:[%s2 + $0x160] sm:$0xf]
  %v123 = vld [vmem:[%s2 + $0x164] sm:$0xf]
  %v124 = vld [vmem:[%s2 + $0x168] sm:$0xf]
  %v125 = vld [vmem:[%s2 + $0x16c] sm:$0xf]
  %v126 = vld [vmem:[%s2 + $0x170] sm:$0xf]
  %v127 = vld [vmem:[%s2 + $0x174] sm:$0xf]
  %v128 = vld [vmem:[%s2 + $0x178] sm:$0xf]
  %v129 = vld [vmem:[%s2 + $0x17c] sm:$0xf]
  %v130 = vld [vmem:[%s2 + $0x180] sm:$0xf]
  %v131 = vld [vmem:[%s2 + $0x184] sm:$0xf]
  %v132 = vld [vmem:[%s2 + $0x188] sm:$0xf]
  %v133 = vld [vmem:[%s2 + $0x18c] sm:$0xf]
  %v134 = vld [vmem:[%s2 + $0x190] sm:$0xf]
  %v135 = vld [vmem:[%s2 + $0x194] sm:$0xf]
  %v136 = vld [vmem:[%s2 + $0x198] sm:$0xf]
  %v137 = vld [vmem:[%s2 + $0x19c] sm:$0xf]
  %v138 = vld [vmem:[%s2 + $0x1a0] sm:$0xf]
  %v139 = vld [vmem:[%s2 + $0x1a4] sm:$0xf]
  %v140 = vld [vmem:[%s2 + $0x1a8] sm:$0xf]
  %v141 = vld [vmem:[%s2 + $0x1ac] sm:$0xf]
  %v142 = vld [vmem:[%s2 + $0x1b0] sm:$0xf]
  %v143 = vld [vmem:[%s2 + $0x1b4] sm:$0xf]
  %v144 = vld [vmem:[%s2 + $0x1b8] sm:$0xf]
  %v145 = vld [vmem:[%s2 + $0x1bc] sm:$0xf]
  %v146 = vld [vmem:[%s2 + $0x1c0] sm:$0xf]
  %v147 = vld [vmem:[%s2 + $0x1c4] sm:$0xf]
  %v148 = vld [vmem:[%s2 + $0x1c8] sm:$0xf]
  %v149 = vld [vmem:[%s2 + $0x1cc] sm:$0xf]
  %v150 = vld [vmem:[%s2 + $0x1d0] sm:$0xf]
  %v151 = vld [vmem:[%s2 + $0x1d4] sm:$0xf]
  %v152 = vld [vmem:[%s2 + $0x1d8] sm:$0xf]
  %v153 = vld [vmem:[%s2 + $0x1dc] sm:$0xf]
  %v154 = vld [vmem:[%s2 + $0x1e0] sm:$0xf]
  %v155 = vld [vmem:[%s2 + $0x1e4] sm:$0xf]
  %v156 = vld [vmem:[%s2 + $0x1e8] sm:$0xf]
  %v157 = vld [vmem:[%s2 + $0x1ec] sm:$0xf]
  %v158 = vld [vmem:[%s2 + $0x1f0] sm:$0xf]
  %v159 = vld [vmem:[%s2 + $0x1f4] sm:$0xf]
  %v160 = vld [vmem:[%s2 + $0x1f8] sm:$0xf]
  %v161 = vld [vmem:[%s2 + $0x1fc] sm:$0xf]
  %v162 = vld [vmem:[%s3] sm:$0x1]
  %v164 = vlaneseq
  %v165 = vshrl.u32 %v164, 7
  %v166 = vsub.s32 0, %v165
  %v167 = vrot.slane %v162, %v166
  %v173 = vunpack.c.l.b16 %v30
  %v174 = vunpack.c.h.b16 %v30
  %v175 = vunpack.c.l.b16 %v31
  %v176 = vunpack.c.h.b16 %v31
  %v177 = vunpack.c.l.b16 %v32
  %v178 = vunpack.c.h.b16 %v32
  %v179 = vunpack.c.l.b16 %v33
  %v180 = vunpack.c.h.b16 %v33
  %v181 = vpack.c.b16 %v173, %v173
  %v182 = vpack.c.b16 %v174, %v174
  %v183 = vpack.c.b16 %v175, %v175
  %v184 = vpack.c.b16 %v176, %v176
  %v185 = vpack.c.b16 %v177, %v177
  %v186 = vpack.c.b16 %v178, %v178
  %v187 = vpack.c.b16 %v179, %v179
  %v188 = vpack.c.b16 %v180, %v180
  %v325 = vunpack.c.l.b16 %v34
  %v326 = vunpack.c.l.b16 %v35
  %v327 = vunpack.c.l.b16 %v36
  %v328 = vunpack.c.l.b16 %v37
  %v329 = vunpack.c.l.b16 %v38
  %v330 = vunpack.c.l.b16 %v39
  %v331 = vunpack.c.l.b16 %v40
  %v332 = vunpack.c.l.b16 %v41
  %v333 = vunpack.c.l.b16 %v42
  %v334 = vunpack.c.l.b16 %v43
  %v335 = vunpack.c.l.b16 %v44
  %v336 = vunpack.c.l.b16 %v45
  %v337 = vunpack.c.l.b16 %v46
  %v338 = vunpack.c.l.b16 %v47
  %v339 = vunpack.c.l.b16 %v48
  %v340 = vunpack.c.l.b16 %v49
  %v341 = vunpack.c.l.b16 %v50
  %v342 = vunpack.c.l.b16 %v51
  %v343 = vunpack.c.l.b16 %v52
  %v344 = vunpack.c.l.b16 %v53
  %v345 = vunpack.c.l.b16 %v54
  %v346 = vunpack.c.l.b16 %v55
  %v347 = vunpack.c.l.b16 %v56
  %v348 = vunpack.c.l.b16 %v57
  %v349 = vunpack.c.l.b16 %v58
  %v350 = vunpack.c.l.b16 %v59
  %v351 = vunpack.c.l.b16 %v60
  %v352 = vunpack.c.l.b16 %v61
  %v353 = vunpack.c.l.b16 %v62
  %v354 = vunpack.c.l.b16 %v63
  %v355 = vunpack.c.l.b16 %v64
  %v356 = vunpack.c.l.b16 %v65
  %v357 = vunpack.c.l.b16 %v66
  %v358 = vunpack.c.l.b16 %v67
  %v359 = vunpack.c.l.b16 %v68
  %v360 = vunpack.c.l.b16 %v69
  %v361 = vunpack.c.l.b16 %v70
  %v362 = vunpack.c.l.b16 %v71
  %v363 = vunpack.c.l.b16 %v72
  %v364 = vunpack.c.l.b16 %v73
  %v365 = vunpack.c.l.b16 %v74
  %v366 = vunpack.c.l.b16 %v75
  %v367 = vunpack.c.l.b16 %v76
  %v368 = vunpack.c.l.b16 %v77
  %v369 = vunpack.c.l.b16 %v78
  %v370 = vunpack.c.l.b16 %v79
  %v371 = vunpack.c.l.b16 %v80
  %v372 = vunpack.c.l.b16 %v81
  %v373 = vunpack.c.l.b16 %v82
  %v374 = vunpack.c.l.b16 %v83
  %v375 = vunpack.c.l.b16 %v84
  %v376 = vunpack.c.l.b16 %v85
  %v377 = vunpack.c.l.b16 %v86
  %v378 = vunpack.c.l.b16 %v87
  %v379 = vunpack.c.l.b16 %v88
  %v380 = vunpack.c.l.b16 %v89
  %v381 = vunpack.c.l.b16 %v90
  %v382 = vunpack.c.l.b16 %v91
  %v383 = vunpack.c.l.b16 %v92
  %v384 = vunpack.c.l.b16 %v93
  %v385 = vunpack.c.l.b16 %v94
  %v386 = vunpack.c.l.b16 %v95
  %v387 = vunpack.c.l.b16 %v96
  %v388 = vunpack.c.l.b16 %v97
  %v389 = vunpack.c.l.b16 %v98
  %v390 = vunpack.c.l.b16 %v99
  %v391 = vunpack.c.l.b16 %v100
  %v392 = vunpack.c.l.b16 %v101
  %v393 = vunpack.c.l.b16 %v102
  %v394 = vunpack.c.l.b16 %v103
  %v395 = vunpack.c.l.b16 %v104
  %v396 = vunpack.c.l.b16 %v105
  %v397 = vunpack.c.l.b16 %v106
  %v398 = vunpack.c.l.b16 %v107
  %v399 = vunpack.c.l.b16 %v108
  %v400 = vunpack.c.l.b16 %v109
  %v401 = vunpack.c.l.b16 %v110
  %v402 = vunpack.c.l.b16 %v111
  %v403 = vunpack.c.l.b16 %v112
  %v404 = vunpack.c.l.b16 %v113
  %v405 = vunpack.c.l.b16 %v114
  %v406 = vunpack.c.l.b16 %v115
  %v407 = vunpack.c.l.b16 %v116
  %v408 = vunpack.c.l.b16 %v117
  %v409 = vunpack.c.l.b16 %v118
  %v410 = vunpack.c.l.b16 %v119
  %v411 = vunpack.c.l.b16 %v120
  %v412 = vunpack.c.l.b16 %v121
  %v413 = vunpack.c.l.b16 %v122
  %v414 = vunpack.c.l.b16 %v123
  %v415 = vunpack.c.l.b16 %v124
  %v416 = vunpack.c.l.b16 %v125
  %v417 = vunpack.c.l.b16 %v126
  %v418 = vunpack.c.l.b16 %v127
  %v419 = vunpack.c.l.b16 %v128
  %v420 = vunpack.c.l.b16 %v129
  %v421 = vunpack.c.l.b16 %v130
  %v422 = vunpack.c.l.b16 %v131
  %v423 = vunpack.c.l.b16 %v132
  %v424 = vunpack.c.l.b16 %v133
  %v425 = vunpack.c.l.b16 %v134
  %v426 = vunpack.c.l.b16 %v135
  %v427 = vunpack.c.l.b16 %v136
  %v428 = vunpack.c.l.b16 %v137
  %v429 = vunpack.c.l.b16 %v138
  %v430 = vunpack.c.l.b16 %v139
  %v431 = vunpack.c.l.b16 %v140
  %v432 = vunpack.c.l.b16 %v141
  %v433 = vunpack.c.l.b16 %v142
  %v434 = vunpack.c.l.b16 %v143
  %v435 = vunpack.c.l.b16 %v144
  %v436 = vunpack.c.l.b16 %v145
  %v437 = vunpack.c.l.b16 %v146
  %v438 = vunpack.c.l.b16 %v147
  %v439 = vunpack.c.l.b16 %v148
  %v440 = vunpack.c.l.b16 %v149
  %v441 = vunpack.c.l.b16 %v150
  %v442 = vunpack.c.l.b16 %v151
  %v443 = vunpack.c.l.b16 %v152
  %v444 = vunpack.c.l.b16 %v153
  %v445 = vunpack.c.l.b16 %v154
  %v446 = vunpack.c.l.b16 %v155
  %v447 = vunpack.c.l.b16 %v156
  %v448 = vunpack.c.l.b16 %v157
  %v449 = vunpack.c.l.b16 %v158
  %v450 = vunpack.c.l.b16 %v159
  %v451 = vunpack.c.l.b16 %v160
  %v452 = vunpack.c.l.b16 %v161
  %v453 = vpack.c.b16 %v326, %v325
  %v454 = vpack.c.b16 %v328, %v327
  %v455 = vpack.c.b16 %v330, %v329
  %v456 = vpack.c.b16 %v332, %v331
  %v457 = vpack.c.b16 %v334, %v333
  %v458 = vpack.c.b16 %v336, %v335
  %v459 = vpack.c.b16 %v338, %v337
  %v460 = vpack.c.b16 %v340, %v339
  %v461 = vpack.c.b16 %v342, %v341
  %v462 = vpack.c.b16 %v344, %v343
  %v463 = vpack.c.b16 %v346, %v345
  %v464 = vpack.c.b16 %v348, %v347
  %v465 = vpack.c.b16 %v350, %v349
  %v466 = vpack.c.b16 %v352, %v351
  %v467 = vpack.c.b16 %v354, %v353
  %v468 = vpack.c.b16 %v356, %v355
  %v469 = vpack.c.b16 %v358, %v357
  %v470 = vpack.c.b16 %v360, %v359
  %v471 = vpack.c.b16 %v362, %v361
  %v472 = vpack.c.b16 %v364, %v363
  %v473 = vpack.c.b16 %v366, %v365
  %v474 = vpack.c.b16 %v368, %v367
  %v475 = vpack.c.b16 %v370, %v369
  %v476 = vpack.c.b16 %v372, %v371
  %v477 = vpack.c.b16 %v374, %v373
  %v478 = vpack.c.b16 %v376, %v375
  %v479 = vpack.c.b16 %v378, %v377
  %v480 = vpack.c.b16 %v380, %v379
  %v481 = vpack.c.b16 %v382, %v381
  %v482 = vpack.c.b16 %v384, %v383
  %v483 = vpack.c.b16 %v386, %v385
  %v484 = vpack.c.b16 %v388, %v387
  %v485 = vpack.c.b16 %v390, %v389
  %v486 = vpack.c.b16 %v392, %v391
  %v487 = vpack.c.b16 %v394, %v393
  %v488 = vpack.c.b16 %v396, %v395
  %v489 = vpack.c.b16 %v398, %v397
  %v490 = vpack.c.b16 %v400, %v399
  %v491 = vpack.c.b16 %v402, %v401
  %v492 = vpack.c.b16 %v404, %v403
  %v493 = vpack.c.b16 %v406, %v405
  %v494 = vpack.c.b16 %v408, %v407
  %v495 = vpack.c.b16 %v410, %v409
  %v496 = vpack.c.b16 %v412, %v411
  %v497 = vpack.c.b16 %v414, %v413
  %v498 = vpack.c.b16 %v416, %v415
  %v499 = vpack.c.b16 %v418, %v417
  %v500 = vpack.c.b16 %v420, %v419
  %v501 = vpack.c.b16 %v422, %v421
  %v502 = vpack.c.b16 %v424, %v423
  %v503 = vpack.c.b16 %v426, %v425
  %v504 = vpack.c.b16 %v428, %v427
  %v505 = vpack.c.b16 %v430, %v429
  %v506 = vpack.c.b16 %v432, %v431
  %v507 = vpack.c.b16 %v434, %v433
  %v508 = vpack.c.b16 %v436, %v435
  %v509 = vpack.c.b16 %v438, %v437
  %v510 = vpack.c.b16 %v440, %v439
  %v511 = vpack.c.b16 %v442, %v441
  %v512 = vpack.c.b16 %v444, %v443
  %v513 = vpack.c.b16 %v446, %v445
  %v514 = vpack.c.b16 %v448, %v447
  %v515 = vpack.c.b16 %v450, %v449
  %v516 = vpack.c.b16 %v452, %v451
  %581 = vmatprep.subr.bf16.mxu0 0
  %582 = vmatpush1.bf16.msra.mxu0 %v460
  %583 = vmatprep.subr.bf16.mxu0 0
  %584 = vmatpush1.bf16.msra.mxu0 %v459
  %585 = vmatprep.subr.bf16.mxu0 0
  %586 = vmatpush1.bf16.msra.mxu0 %v458
  %587 = vmatprep.subr.bf16.mxu0 0
  %588 = vmatpush1.bf16.msra.mxu0 %v457
  %589 = vmatprep.subr.bf16.mxu0 0
  %590 = vmatpush1.bf16.msra.mxu0 %v456
  %591 = vmatprep.subr.bf16.mxu0 0
  %592 = vmatpush1.bf16.msra.mxu0 %v455
  %593 = vmatprep.subr.bf16.mxu0 0
  %594 = vmatpush1.bf16.msra.mxu0 %v454
  %595 = vmatprep.subr.bf16.mxu0 0
  %596 = vmatpush1.bf16.msra.mxu0 %v453
  %597 = vmatprep.subr.bf16.mxu0 0
  %598 = vmatpush2.bf16.msra.mxu0 %v468
  %599 = vmatprep.subr.bf16.mxu0 0
  %600 = vmatpush2.bf16.msra.mxu0 %v467
  %601 = vmatprep.subr.bf16.mxu0 0
  %602 = vmatpush2.bf16.msra.mxu0 %v466
  %603 = vmatprep.subr.bf16.mxu0 0
  %604 = vmatpush2.bf16.msra.mxu0 %v465
  %605 = vmatprep.subr.bf16.mxu0 0
  %606 = vmatpush2.bf16.msra.mxu0 %v464
  %607 = vmatprep.subr.bf16.mxu0 0
  %608 = vmatpush2.bf16.msra.mxu0 %v463
  %609 = vmatprep.subr.bf16.mxu0 0
  %610 = vmatpush2.bf16.msra.mxu0 %v462
  %611 = vmatprep.subr.bf16.mxu0 0
  %612 = vmatpush2.bf16.msra.mxu0 %v461
  %613 = vmatprep.mubr.bf16.mxu0 %v182
  %614 = vmatmul.mubr.bf16.gmra.mxu0 %v181
  %v615 = vpop.f32.mrf.mxu0
  %v616 = vadd.f32 %v167, %v615
  %v617 = vpop.f32.mrf.mxu0
  %v618 = vpop.f32.mrf.mxu0
  %v619 = vpop.f32.mrf.mxu0
  %620 = vdwg.mxu0
  %621 = vmatprep.subr.bf16.mxu0 0
  %622 = vmatpush1.bf16.msra.mxu0 %v476
  %623 = vmatprep.subr.bf16.mxu0 0
  %624 = vmatpush1.bf16.msra.mxu0 %v475
  %625 = vmatprep.subr.bf16.mxu0 0
  %626 = vmatpush1.bf16.msra.mxu0 %v474
  %627 = vmatprep.subr.bf16.mxu0 0
  %628 = vmatpush1.bf16.msra.mxu0 %v473
  %629 = vmatprep.subr.bf16.mxu0 0
  %630 = vmatpush1.bf16.msra.mxu0 %v472
  %631 = vmatprep.subr.bf16.mxu0 0
  %632 = vmatpush1.bf16.msra.mxu0 %v471
  %633 = vmatprep.subr.bf16.mxu0 0
  %634 = vmatpush1.bf16.msra.mxu0 %v470
  %635 = vmatprep.subr.bf16.mxu0 0
  %636 = vmatpush1.bf16.msra.mxu0 %v469
  %637 = vmatprep.subr.bf16.mxu0 0
  %638 = vmatpush2.bf16.msra.mxu0 %v484
  %639 = vmatprep.subr.bf16.mxu0 0
  %640 = vmatpush2.bf16.msra.mxu0 %v483
  %641 = vmatprep.subr.bf16.mxu0 0
  %642 = vmatpush2.bf16.msra.mxu0 %v482
  %643 = vmatprep.subr.bf16.mxu0 0
  %644 = vmatpush2.bf16.msra.mxu0 %v481
  %645 = vmatprep.subr.bf16.mxu0 0
  %646 = vmatpush2.bf16.msra.mxu0 %v480
  %647 = vmatprep.subr.bf16.mxu0 0
  %648 = vmatpush2.bf16.msra.mxu0 %v479
  %649 = vmatprep.subr.bf16.mxu0 0
  %650 = vmatpush2.bf16.msra.mxu0 %v478
  %651 = vmatprep.subr.bf16.mxu0 0
  %652 = vmatpush2.bf16.msra.mxu0 %v477
  %653 = vmatprep.mubr.bf16.mxu0 %v184
  %654 = vmatmul.mubr.bf16.gmra.mxu0 %v183
  %v655 = vpop.f32.mrf.mxu0
  %v656 = vadd.f32 %v616, %v655
  %v657 = vpop.f32.mrf.mxu0
  %v658 = vpop.f32.mrf.mxu0
  %v659 = vpop.f32.mrf.mxu0
  %660 = vdwg.mxu0
  %661 = vmatprep.subr.bf16.mxu0 0
  %662 = vmatpush1.bf16.msra.mxu0 %v492
  %663 = vmatprep.subr.bf16.mxu0 0
  %664 = vmatpush1.bf16.msra.mxu0 %v491
  %665 = vmatprep.subr.bf16.mxu0 0
  %666 = vmatpush1.bf16.msra.mxu0 %v490
  %667 = vmatprep.subr.bf16.mxu0 0
  %668 = vmatpush1.bf16.msra.mxu0 %v489
  %669 = vmatprep.subr.bf16.mxu0 0
  %670 = vmatpush1.bf16.msra.mxu0 %v488
  %671 = vmatprep.subr.bf16.mxu0 0
  %672 = vmatpush1.bf16.msra.mxu0 %v487
  %673 = vmatprep.subr.bf16.mxu0 0
  %674 = vmatpush1.bf16.msra.mxu0 %v486
  %675 = vmatprep.subr.bf16.mxu0 0
  %676 = vmatpush1.bf16.msra.mxu0 %v485
  %677 = vmatprep.subr.bf16.mxu0 0
  %678 = vmatpush2.bf16.msra.mxu0 %v500
  %679 = vmatprep.subr.bf16.mxu0 0
  %680 = vmatpush2.bf16.msra.mxu0 %v499
  %681 = vmatprep.subr.bf16.mxu0 0
  %682 = vmatpush2.bf16.msra.mxu0 %v498
  %683 = vmatprep.subr.bf16.mxu0 0
  %684 = vmatpush2.bf16.msra.mxu0 %v497
  %685 = vmatprep.subr.bf16.mxu0 0
  %686 = vmatpush2.bf16.msra.mxu0 %v496
  %687 = vmatprep.subr.bf16.mxu0 0
  %688 = vmatpush2.bf16.msra.mxu0 %v495
  %689 = vmatprep.subr.bf16.mxu0 0
  %690 = vmatpush2.bf16.msra.mxu0 %v494
  %691 = vmatprep.subr.bf16.mxu0 0
  %692 = vmatpush2.bf16.msra.mxu0 %v493
  %693 = vmatprep.mubr.bf16.mxu0 %v186
  %694 = vmatmul.mubr.bf16.gmra.mxu0 %v185
  %v695 = vpop.f32.mrf.mxu0
  %v696 = vadd.f32 %v656, %v695
  %v697 = vpop.f32.mrf.mxu0
  %v698 = vpop.f32.mrf.mxu0
  %v699 = vpop.f32.mrf.mxu0
  %700 = vdwg.mxu0
  %701 = vmatprep.subr.bf16.mxu0 0
  %702 = vmatpush1.bf16.msra.mxu0 %v508
  %703 = vmatprep.subr.bf16.mxu0 0
  %704 = vmatpush1.bf16.msra.mxu0 %v507
  %705 = vmatprep.subr.bf16.mxu0 0
  %706 = vmatpush1.bf16.msra.mxu0 %v506
  %707 = vmatprep.subr.bf16.mxu0 0
  %708 = vmatpush1.bf16.msra.mxu0 %v505
  %709 = vmatprep.subr.bf16.mxu0 0
  %710 = vmatpush1.bf16.msra.mxu0 %v504
  %711 = vmatprep.subr.bf16.mxu0 0
  %712 = vmatpush1.bf16.msra.mxu0 %v503
  %713 = vmatprep.subr.bf16.mxu0 0
  %714 = vmatpush1.bf16.msra.mxu0 %v502
  %715 = vmatprep.subr.bf16.mxu0 0
  %716 = vmatpush1.bf16.msra.mxu0 %v501
  %717 = vmatprep.subr.bf16.mxu0 0
  %718 = vmatpush2.bf16.msra.mxu0 %v516
  %719 = vmatprep.subr.bf16.mxu0 0
  %720 = vmatpush2.bf16.msra.mxu0 %v515
  %721 = vmatprep.subr.bf16.mxu0 0
  %722 = vmatpush2.bf16.msra.mxu0 %v514
  %723 = vmatprep.subr.bf16.mxu0 0
  %724 = vmatpush2.bf16.msra.mxu0 %v513
  %725 = vmatprep.subr.bf16.mxu0 0
  %726 = vmatpush2.bf16.msra.mxu0 %v512
  %727 = vmatprep.subr.bf16.mxu0 0
  %728 = vmatpush2.bf16.msra.mxu0 %v511
  %729 = vmatprep.subr.bf16.mxu0 0
  %730 = vmatpush2.bf16.msra.mxu0 %v510
  %731 = vmatprep.subr.bf16.mxu0 0
  %732 = vmatpush2.bf16.msra.mxu0 %v509
  %733 = vmatprep.mubr.bf16.mxu0 %v188
  %734 = vmatmul.mubr.bf16.gmra.mxu0 %v187
  %v735 = vpop.f32.mrf.mxu0
  %v736 = vadd.f32 %v696, %v735
  %v737 = vpop.f32.mrf.mxu0
  %v738 = vpop.f32.mrf.mxu0
  %v739 = vpop.f32.mrf.mxu0
  %740 = vdwg.mxu0
  %v741 = vmax.f32 %v736, 0.0
  %v742 = vpack.c.bf16 %v741, %v741
  %v743 = vld [vmem:[%s4] sm:$0xff]
  %v744 = vld [vmem:[%s4 + $0x8] sm:$0xff]
  %v745 = vld [vmem:[%s4 + $0x10] sm:$0xff]
  %v746 = vld [vmem:[%s4 + $0x18] sm:$0xff]
  %v747 = vld [vmem:[%s4 + $0x20] sm:$0xff]
  %v748 = vld [vmem:[%s4 + $0x28] sm:$0xff]
  %v749 = vld [vmem:[%s4 + $0x30] sm:$0xff]
  %v750 = vld [vmem:[%s4 + $0x38] sm:$0xff]
  %v751 = vld [vmem:[%s4 + $0x40] sm:$0xff]
  %v752 = vld [vmem:[%s4 + $0x48] sm:$0xff]
  %v753 = vld [vmem:[%s4 + $0x50] sm:$0xff]
  %v754 = vld [vmem:[%s4 + $0x58] sm:$0xff]
  %v755 = vld [vmem:[%s4 + $0x60] sm:$0xff]
  %v756 = vld [vmem:[%s4 + $0x68] sm:$0xff]
  %v757 = vld [vmem:[%s4 + $0x70] sm:$0xff]
  %v758 = vld [vmem:[%s4 + $0x78] sm:$0xff]
  %v759 = vld [vmem:[%s5] sm:$0x3]
  %v761 = vlaneseq
  %v762 = vshrl.u32 %v761, 7
  %v763 = vsub.s32 0, %v762
  %v764 = vrot.slane %v759, %v763
  %v765 = vlaneseq
  %v766 = vshrl.u32 %v765, 7
  %v767 = vsub.s32 1, %v766
  %v768 = vrot.slane %v759, %v767
  %v787 = vunpack.c.l.b16 %v743
  %v788 = vunpack.c.h.b16 %v743
  %v789 = vunpack.c.l.b16 %v744
  %v790 = vunpack.c.h.b16 %v744
  %v791 = vunpack.c.l.b16 %v745
  %v792 = vunpack.c.h.b16 %v745
  %v793 = vunpack.c.l.b16 %v746
  %v794 = vunpack.c.h.b16 %v746
  %v795 = vunpack.c.l.b16 %v747
  %v796 = vunpack.c.h.b16 %v747
  %v797 = vunpack.c.l.b16 %v748
  %v798 = vunpack.c.h.b16 %v748
  %v799 = vunpack.c.l.b16 %v749
  %v800 = vunpack.c.h.b16 %v749
  %v801 = vunpack.c.l.b16 %v750
  %v802 = vunpack.c.h.b16 %v750
  %v803 = vunpack.c.l.b16 %v751
  %v804 = vunpack.c.h.b16 %v751
  %v805 = vunpack.c.l.b16 %v752
  %v806 = vunpack.c.h.b16 %v752
  %v807 = vunpack.c.l.b16 %v753
  %v808 = vunpack.c.h.b16 %v753
  %v809 = vunpack.c.l.b16 %v754
  %v810 = vunpack.c.h.b16 %v754
  %v811 = vunpack.c.l.b16 %v755
  %v812 = vunpack.c.h.b16 %v755
  %v813 = vunpack.c.l.b16 %v756
  %v814 = vunpack.c.h.b16 %v756
  %v815 = vunpack.c.l.b16 %v757
  %v816 = vunpack.c.h.b16 %v757
  %v817 = vunpack.c.l.b16 %v758
  %v818 = vunpack.c.h.b16 %v758
  %v819 = vpack.c.b16 %v789, %v787
  %v820 = vpack.c.b16 %v790, %v788
  %v821 = vpack.c.b16 %v793, %v791
  %v822 = vpack.c.b16 %v794, %v792
  %v823 = vpack.c.b16 %v797, %v795
  %v824 = vpack.c.b16 %v798, %v796
  %v825 = vpack.c.b16 %v801, %v799
  %v826 = vpack.c.b16 %v802, %v800
  %v827 = vpack.c.b16 %v805, %v803
  %v828 = vpack.c.b16 %v806, %v804
  %v829 = vpack.c.b16 %v809, %v807
  %v830 = vpack.c.b16 %v810, %v808
  %v831 = vpack.c.b16 %v813, %v811
  %v832 = vpack.c.b16 %v814, %v812
  %v833 = vpack.c.b16 %v817, %v815
  %v834 = vpack.c.b16 %v818, %v816
  %851 = vmatprep.subr.bf16.mxu0 %v834
  %852 = vmatpush1.bf16.msra.mxu0 %v833
  %853 = vmatprep.subr.bf16.mxu0 %v832
  %854 = vmatpush1.bf16.msra.mxu0 %v831
  %855 = vmatprep.subr.bf16.mxu0 %v830
  %856 = vmatpush1.bf16.msra.mxu0 %v829
  %857 = vmatprep.subr.bf16.mxu0 %v828
  %858 = vmatpush1.bf16.msra.mxu0 %v827
  %859 = vmatprep.subr.bf16.mxu0 %v826
  %860 = vmatpush1.bf16.msra.mxu0 %v825
  %861 = vmatprep.subr.bf16.mxu0 %v824
  %862 = vmatpush1.bf16.msra.mxu0 %v823
  %863 = vmatprep.subr.bf16.mxu0 %v822
  %864 = vmatpush1.bf16.msra.mxu0 %v821
  %865 = vmatprep.subr.bf16.mxu0 %v820
  %866 = vmatpush1.bf16.msra.mxu0 %v819
  %867 = vmatprep.subr.bf16.mxu0 0
  %868 = vmatpush2.bf16.msra.mxu0 0
  %869 = vmatprep.subr.bf16.mxu0 0
  %870 = vmatpush2.bf16.msra.mxu0 0
  %871 = vmatprep.subr.bf16.mxu0 0
  %872 = vmatpush2.bf16.msra.mxu0 0
  %873 = vmatprep.subr.bf16.mxu0 0
  %874 = vmatpush2.bf16.msra.mxu0 0
  %875 = vmatprep.subr.bf16.mxu0 0
  %876 = vmatpush2.bf16.msra.mxu0 0
  %877 = vmatprep.subr.bf16.mxu0 0
  %878 = vmatpush2.bf16.msra.mxu0 0
  %879 = vmatprep.subr.bf16.mxu0 0
  %880 = vmatpush2.bf16.msra.mxu0 0
  %881 = vmatprep.subr.bf16.mxu0 0
  %882 = vmatpush2.bf16.msra.mxu0 0
  %883 = vmatprep.mubr.bf16.mxu0 0
  %884 = vmatmul.mubr.bf16.gmra.mxu0 %v742
  %v885 = vpop.f32.mrf.mxu0
  %v886 = vadd.f32 %v764, %v885
  %v887 = vpop.f32.mrf.mxu0
  %v888 = vadd.f32 %v768, %v887
  %v889 = vpop.f32.mrf.mxu0
  %v890 = vpop.f32.mrf.mxu0
  %891 = vdwg.mxu0
  %v892 = vmax.f32 %v886, 0.0
  %v893 = vmax.f32 %v888, 0.0
  %v894 = vld [vmem:[%s6] sm:$0xff]
  %v895 = vld [vmem:[%s6 + $0x8] sm:$0xff]
  %v896 = vld [vmem:[%s6 + $0x10] sm:$0xff]
  %v897 = vld [vmem:[%s6 + $0x18] sm:$0xff]
  %v898 = vld [vmem:[%s6 + $0x20] sm:$0xff]
  %v899 = vld [vmem:[%s6 + $0x28] sm:$0xff]
  %v900 = vld [vmem:[%s6 + $0x30] sm:$0xff]
  %v901 = vld [vmem:[%s6 + $0x38] sm:$0xff]
  %v902 = vld [vmem:[%s6 + $0x40] sm:$0xff]
  %v903 = vld [vmem:[%s6 + $0x48] sm:$0xff]
  %v904 = vld [vmem:[%s6 + $0x50] sm:$0xff]
  %v905 = vld [vmem:[%s6 + $0x58] sm:$0xff]
  %v906 = vld [vmem:[%s6 + $0x60] sm:$0xff]
  %v907 = vld [vmem:[%s6 + $0x68] sm:$0xff]
  %v908 = vld [vmem:[%s6 + $0x70] sm:$0xff]
  %v909 = vld [vmem:[%s6 + $0x78] sm:$0xff]
  %v910 = vld [vmem:[%s6 + $0x80] sm:$0xff]
  %v911 = vld [vmem:[%s6 + $0x88] sm:$0xff]
  %v912 = vld [vmem:[%s6 + $0x90] sm:$0xff]
  %v913 = vld [vmem:[%s6 + $0x98] sm:$0xff]
  %v914 = vld [vmem:[%s6 + $0xa0] sm:$0xff]
  %v915 = vld [vmem:[%s6 + $0xa8] sm:$0xff]
  %v916 = vld [vmem:[%s6 + $0xb0] sm:$0xff]
  %v917 = vld [vmem:[%s6 + $0xb8] sm:$0xff]
  %v918 = vld [vmem:[%s6 + $0xc0] sm:$0xff]
  %v919 = vld [vmem:[%s6 + $0xc8] sm:$0xff]
  %v920 = vld [vmem:[%s6 + $0xd0] sm:$0xff]
  %v921 = vld [vmem:[%s6 + $0xd8] sm:$0xff]
  %v922 = vld [vmem:[%s6 + $0xe0] sm:$0xff]
  %v923 = vld [vmem:[%s6 + $0xe8] sm:$0xff]
  %v924 = vld [vmem:[%s6 + $0xf0] sm:$0xff]
  %v925 = vld [vmem:[%s6 + $0xf8] sm:$0xff]
  %v926 = vld [vmem:[%s7] sm:$0x1]
  %v928 = vlaneseq
  %v929 = vshrl.u32 %v928, 7
  %v930 = vsub.s32 0, %v929
  %v931 = vrot.slane %v926, %v930
  %933 = vmatprep.subr.mxu0 0.0
  %934 = vmatpush1.msra.mxu0 %v909
  %935 = vmatprep.subr.mxu0 0.0
  %936 = vmatpush1.msra.mxu0 %v908
  %937 = vmatprep.subr.mxu0 0.0
  %938 = vmatpush1.msra.mxu0 %v907
  %939 = vmatprep.subr.mxu0 0.0
  %940 = vmatpush1.msra.mxu0 %v906
  %941 = vmatprep.subr.mxu0 0.0
  %942 = vmatpush1.msra.mxu0 %v905
  %943 = vmatprep.subr.mxu0 0.0
  %944 = vmatpush1.msra.mxu0 %v904
  %945 = vmatprep.subr.mxu0 0.0
  %946 = vmatpush1.msra.mxu0 %v903
  %947 = vmatprep.subr.mxu0 0.0
  %948 = vmatpush1.msra.mxu0 %v902
  %949 = vmatprep.subr.mxu0 0.0
  %950 = vmatpush1.msra.mxu0 %v901
  %951 = vmatprep.subr.mxu0 0.0
  %952 = vmatpush1.msra.mxu0 %v900
  %953 = vmatprep.subr.mxu0 0.0
  %954 = vmatpush1.msra.mxu0 %v899
  %955 = vmatprep.subr.mxu0 0.0
  %956 = vmatpush1.msra.mxu0 %v898
  %957 = vmatprep.subr.mxu0 0.0
  %958 = vmatpush1.msra.mxu0 %v897
  %959 = vmatprep.subr.mxu0 0.0
  %960 = vmatpush1.msra.mxu0 %v896
  %961 = vmatprep.subr.mxu0 0.0
  %962 = vmatpush1.msra.mxu0 %v895
  %963 = vmatprep.subr.mxu0 0.0
  %964 = vmatpush1.msra.mxu0 %v894
  %965 = vmatprep.subr.mxu0 0.0
  %966 = vmatpush2.msra.mxu0 %v925
  %967 = vmatprep.subr.mxu0 0.0
  %968 = vmatpush2.msra.mxu0 %v924
  %969 = vmatprep.subr.mxu0 0.0
  %970 = vmatpush2.msra.mxu0 %v923
  %971 = vmatprep.subr.mxu0 0.0
  %972 = vmatpush2.msra.mxu0 %v922
  %973 = vmatprep.subr.mxu0 0.0
  %974 = vmatpush2.msra.mxu0 %v921
  %975 = vmatprep.subr.mxu0 0.0
  %976 = vmatpush2.msra.mxu0 %v920
  %977 = vmatprep.subr.mxu0 0.0
  %978 = vmatpush2.msra.mxu0 %v919
  %979 = vmatprep.subr.mxu0 0.0
  %980 = vmatpush2.msra.mxu0 %v918
  %981 = vmatprep.subr.mxu0 0.0
  %982 = vmatpush2.msra.mxu0 %v917
  %983 = vmatprep.subr.mxu0 0.0
  %984 = vmatpush2.msra.mxu0 %v916
  %985 = vmatprep.subr.mxu0 0.0
  %986 = vmatpush2.msra.mxu0 %v915
  %987 = vmatprep.subr.mxu0 0.0
  %988 = vmatpush2.msra.mxu0 %v914
  %989 = vmatprep.subr.mxu0 0.0
  %990 = vmatpush2.msra.mxu0 %v913
  %991 = vmatprep.subr.mxu0 0.0
  %992 = vmatpush2.msra.mxu0 %v912
  %993 = vmatprep.subr.mxu0 0.0
  %994 = vmatpush2.msra.mxu0 %v911
  %995 = vmatprep.subr.mxu0 0.0
  %996 = vmatpush2.msra.mxu0 %v910
  %997 = vmatprep.mubr.f32.mxu0 %v893
  %998 = vmatmul.mubr.f32.gmra.mxu0 %v892
  %v999 = vpop.f32.mrf.mxu0
  %v1000 = vadd.f32 %v931, %v999
  %v1001 = vpop.f32.mrf.mxu0
  %1002 = vdwg.mxu0
  %vm1003 = vcmask 121856
  %v1004 = vsel %vm1003, %v1000, -inf
  %1005 = vmax.xlane.f32.xlu0 %v1004
  %v1006 = vpop.xlane.xlu0 %1005
  %v1007 = vsub.f32 %v1000, %v1006
  %v1008 = vmul.f32 %v1007, 1.442695
  %v1009 = vpow.pop %v1008
  %v1010 = vsel %vm1003, %v1009, 0.0
  %1011 = vadd.xlane.f32.xlu0 %v1010
  %v1012 = vpop.xlane.xlu0 %1011
  %v1013 = vlog2.pop %v1012
  %v1014 = vmul.f32 %v1013, 0.6931472
  %v1015 = vmul.f32 %v1009, %v1007
  %v1016 = vsel %vm1003, %v1015, 0.0
  %1017 = vadd.xlane.f32.xlu0 %v1016
  %v1018 = vpop.xlane.xlu0 %1017
  %v1019 = vrcp.pop %v1012
  %v1020 = vmul.f32 %v1018, %v1019
  %v1021 = vsub.f32 %v1014, %v1020
  %v1022 = vld [vmem:[%s1] sm:$0xff]
  %v1023 = vadd.f32 %v1000, %v1022
  %v1024 = vlaneseq
  %v1025 = vand.u32 %v1024, 127
  %v1026 = vsel %vm1003, %v1023, -inf
  %1027 = vmax.xlane.f32.xlu0 %v1026
  %v1028 = vpop.xlane.xlu0 %1027
  %vm1029 = vcmp.ge.f32.partialorder %v1023, %v1028
  %v1030 = vsel %vm1029, %v1025, 15
  %v1031 = vsel %vm1003, %v1030, 2147483647
  %v1032 = vand.u32 %v1031, 65535
  %v1033 = vshra.s32 %v1031, 16
  %v1034 = vcvt.s32.f32 %v1032
  %v1035 = vcvt.s32.f32 %v1033
  %1036 = vmin.xlane.f32.xlu0 %v1035
  %v1037 = vpop.xlane.xlu0 %1036
  %vm1038 = vcmp.eq.f32.partialorder %v1035, %v1037
  %v1039 = vsel %vm1038, %v1034, inf
  %1040 = vmin.xlane.f32.xlu0 %v1039
  %v1041 = vpop.xlane.xlu0 %1040
  %v1042 = vcvt.f32.s32 %v1041
  %v1043 = vcvt.f32.s32 %v1037
  %v1044 = vshll.u32 %v1043, 16
  %v1045 = vadd.s32 %v1044, %v1042
  %vm1046 = vcmp.eq.s32.totalorder %v1025, %v1045
  %v1047 = vsel %vm1046, 1, 0
  %v1048 = vcvt.s32.f32 %v1047
  %v1049 = vmul.f32 %v1048, %v1007
  %v1050 = vsel %vm1003, %v1049, 0.0
  %1051 = vadd.xlane.f32.xlu0 %v1050
  %v1052 = vpop.xlane.xlu0 %1051
  %v1053 = vsub.f32 %v1014, %v1052
  %vm1054 = vcmp.eq.s32.totalorder %v1025, 0
  %v1055 = vcvt.s32.f32 %v1045
  %vm1056 = vcmp.eq.s32.totalorder %v1025, 1
  %vm1057 = vcmp.eq.s32.totalorder %v1025, 2
  %vm1058 = vcmp.eq.s32.totalorder %v1025, 3
  %1060 = vset.pattern.permute.xlu0 15
  %1061 = vperm.xlu0 %1060, %v1000
  %v1062 = vpop.permute.xlu0 %1061
  %v1064 = vsel %vm1058, %v1062, 0.0
  %v1065 = vsel %vm1057, %v1021, %v1064
  %v1066 = vsel %vm1056, %v1053, %v1065
  %v1067 = vsel %vm1054, %v1055, %v1066
  %1068 = vst [vmem:[%s8] sm:$0xff] %v1067
  // Predicated region
  $region34: #{categorical_actor_critic_policy.1} parent=0 // pred_check
    _
  $region35: #{categorical_actor_critic_policy.1} parent=0 // pred_check_branch
    %1070 = sbr.rel (0) target = $region37
  $region36: #{categorical_actor_critic_policy.1} parent=0 // pred_region
    _
  $region37: #{categorical_actor_critic_policy.1} parent=0 // pred_fallthru
    _
  // Predicated region
  $region38: #{categorical_actor_critic_policy.1} parent=0 // pred_check
    _
  $region39: #{categorical_actor_critic_policy.1} parent=0 // pred_check_branch
    %1072 = sbr.rel (0) target = $region41
  $region40: #{categorical_actor_critic_policy.1} parent=0 // pred_region
    _
  $region41: #{categorical_actor_critic_policy.1} parent=0 // pred_fallthru
    _

</llo_original>
